<compile_context>
chip_gen: v7x
topology: tpu7x:2x2x1
jax: 0.10.0
libtpu: 0.0.40
codegen_flags: <defaults>
</compile_context>

<pallas_src>
import functools
import math

import jax
import jax.numpy as jnp
from jax.experimental import pallas as pl
from jax.experimental.pallas import tpu as pltpu


def _tanh(h, bf16):
    if bf16:
        return jnp.tanh(h.astype(jnp.bfloat16)).astype(jnp.float32)
    return jnp.tanh(h)


def actor_kernel(x_ref, w1_ref, b1_ref, w2_ref, b2_ref, w3_ref, b3_ref, o_ref,
                 *, bf16_tanh=False):
    # x:  (3, Bt)   state tile, batch on lanes
    # w1: (H, 3)    b1: (H, 1)
    # w2: (H, H)    b2: (H, 1)
    # w3: (1, H)    b3: (1,) scalar in SMEM
    # o:  (1, Bt)
    x = x_ref[...]

    # Layer 1 (K=3): padded matmul on the MXU -- MXU has huge slack here, so
    # the K-padding waste is free and it takes ~3x pressure off the VPU.
    h1 = jnp.dot(w1_ref[...], x, preferred_element_type=jnp.float32) + b1_ref[...]
    h1 = _tanh(h1, bf16_tanh)

    # Layer 2 (H x H): MXU matmul; output (H, Bt) stays lane-dense in batch.
    h2 = jnp.dot(w2_ref[...], h1, preferred_element_type=jnp.float32) + b2_ref[...]
    h2 = _tanh(h2, bf16_tanh)

    # Layer 3 (N=1): 1-row MXU matmul (removes per-element vmul + XLU reduce).
    out = jnp.dot(w3_ref[...], h2, preferred_element_type=jnp.float32) + b3_ref[0]
    o_ref[...] = out.astype(o_ref.dtype)


def _round_up(x, m):
    return ((x + m - 1) // m) * m


def _choose_tiling(B, block_b):
    """Pick a lane-aligned batch tile and padded batch size.

    - Cap the tile at 16384 so ~6 live (H, bt) f32 intermediates plus
      double-buffered I/O stay well inside the 32 MiB scoped-VMEM default on
      every generation (v7x has only 64 MiB physical VMEM).
    - Once the batch is large enough, force >= 2 grid steps so the "parallel"
      batch axis actually feeds both TensorCores on v7x.
    """
    b128 = _round_up(max(B, 1), 128)
    bt_cap = _round_up(max(128, min(block_b, 16384)), 128)
    n_tiles = max(1, -(-b128 // bt_cap))
    if n_tiles == 1 and b128 >= 4096:
        n_tiles = 2
    bt = _round_up(-(-b128 // n_tiles), 128)
    return bt, n_tiles * bt


@functools.partial(jax.jit, static_argnames=("block_b", "bf16_tanh"))
def actor_forward(state, params, *, block_b=16384, bf16_tanh=False):
    """state: (B, 3) float32. Returns (B, 1) float32 policy."""
    B = state.shape[0]
    bt, b_pad = _choose_tiling(B, block_b)
    n_tiles = b_pad // bt

    # Feature-major layout: batch on the lane axis; pad batch to a tile
    # multiple.  Kept under the same jit as the kernel so XLA fuses the
    # transpose/pad with the dispatch instead of a separate HBM pass.
    state_t = jnp.pad(state.astype(jnp.float32).T, ((0, 0), (0, b_pad - B)))

    w1, b1 = params["w1"], params["b1"]
    w2, b2 = params["w2"], params["b2"]
    w3, b3 = params["w3"], params["b3"]

    def resident(shape):
        # Constant block index: weight/bias stays resident in VMEM across steps.
        return pl.BlockSpec(shape, lambda i: tuple(0 for _ in shape),
                            memory_space=pltpu.VMEM)

    out = pl.pallas_call(
        functools.partial(actor_kernel, bf16_tanh=bf16_tanh),
        out_shape=jax.ShapeDtypeStruct((1, b_pad), jnp.float32),
        grid=(n_tiles,),
        in_specs=[
            pl.BlockSpec((3, bt), lambda i: (0, i), memory_space=pltpu.VMEM),
            resident(w1.shape), resident(b1.shape),
            resident(w2.shape), resident(b2.shape),
            resident(w3.shape),
            pl.BlockSpec(memory_space=pltpu.SMEM),   # scalar b3
        ],
        out_specs=pl.BlockSpec((1, bt), lambda i: (0, i), memory_space=pltpu.VMEM),
        compiler_params=pltpu.CompilerParams(
            dimension_semantics=("parallel",)),      # shard batch tiles across TCs
    )(state_t, w1, b1, w2, b2, w3, b3)

    return out[0, :B].reshape(B, 1)


def init_actor_params(key, hidden_size):
    """PyTorch-style default Linear init (uniform +/- 1/sqrt(fan_in)).
    Weights in PyTorch (out_features, in_features) layout; biases for layers
    1/2 as column vectors (out_features, 1); w3 kept as (1, H) for the 1-row
    MXU matmul; b3 as a (1,) scalar."""
    def linear(key, fan_in, fan_out):
        kw, kb = jax.random.split(key)
        bound = 1.0 / math.sqrt(fan_in)
        w = jax.random.uniform(kw, (fan_out, fan_in), jnp.float32, -bound, bound)
        b = jax.random.uniform(kb, (fan_out, 1), jnp.float32, -bound, bound)
        return w, b

    k1, k2, k3 = jax.random.split(key, 3)
    w1, b1 = linear(k1, 3, hidden_size)              # (H, 3), (H, 1)
    w2, b2 = linear(k2, hidden_size, hidden_size)    # (H, H), (H, 1)
    w3, b3 = linear(k3, hidden_size, 1)              # (1, H), (1, 1)
    return {"w1": w1, "b1": b1, "w2": w2, "b2": b2,
            "w3": w3, "b3": b3.reshape(1)}


def actor_reference(state, params):
    h1 = jnp.tanh(state @ params["w1"].T + params["b1"].T)
    h2 = jnp.tanh(h1 @ params["w2"].T + params["b2"].T)
    return h2 @ params["w3"].T + params["b3"]


if __name__ == "__main__":
    key = jax.random.PRNGKey(0)
    k_params, k_state = jax.random.split(key)

    hidden_size = 32
    batch = 8
    params = init_actor_params(k_params, hidden_size)
    state = jax.random.normal(k_state, (batch, 3), jnp.float32)

    policy = actor_forward(state, params)
    policy = jax.block_until_ready(policy)

    ref = actor_reference(state, params)
    assert policy.shape == (batch, 1), policy.shape
    assert jnp.allclose(policy, ref, atol=1e-5, rtol=1e-5), (
        f"max abs err {jnp.max(jnp.abs(policy - ref))}"
    )

    print("KERNEL_OK")
</pallas_src>

<mosaic_0001>
module attributes {stable_mosaic.version = 11 : i64} {
  func.func @actor_kernel(%arg0: i32, %arg1: memref<3x128xf32, #tpu.memory_space<vmem>>, %arg2: memref<32x3xf32, #tpu.memory_space<vmem>>, %arg3: memref<32x1xf32, #tpu.memory_space<vmem>>, %arg4: memref<32x32xf32, #tpu.memory_space<vmem>>, %arg5: memref<32x1xf32, #tpu.memory_space<vmem>>, %arg6: memref<1x32xf32, #tpu.memory_space<vmem>>, %arg7: memref<1xf32, #tpu.memory_space<smem>>, %arg8: memref<1x128xf32, #tpu.memory_space<vmem>>) attributes {dimension_semantics = [#tpu.dimension_semantics<parallel>], iteration_bounds = array<i64: 1>, scalar_prefetch = 0 : i64, scratch_operands = 0 : i64, tpu.core_type = #tpu.core_type<tc>, window_params = [{transform_indices = @transform_0, window_bounds = array<i64: 3, 128>}, {pipeline_mode = #tpu.pipeline_mode<synchronous>, transform_indices = @transform_1, window_bounds = array<i64: 32, 3>}, {pipeline_mode = #tpu.pipeline_mode<synchronous>, transform_indices = @transform_2, window_bounds = array<i64: 32, 1>}, {pipeline_mode = #tpu.pipeline_mode<synchronous>, transform_indices = @transform_3, window_bounds = array<i64: 32, 32>}, {pipeline_mode = #tpu.pipeline_mode<synchronous>, transform_indices = @transform_4, window_bounds = array<i64: 32, 1>}, {pipeline_mode = #tpu.pipeline_mode<synchronous>, transform_indices = @transform_5, window_bounds = array<i64: 1, 32>}, {transform_indices = @transform_6, window_bounds = array<i64: 1>}, {transform_indices = @transform_7, window_bounds = array<i64: 1, 128>}]} {
    %c0 = arith.constant 0 : index
    %c0_0 = arith.constant 0 : index
    %0 = vector.load %arg1[%c0, %c0_0] : memref<3x128xf32, #tpu.memory_space<vmem>>, vector<3x128xf32>
    %c0_1 = arith.constant 0 : index
    %c0_2 = arith.constant 0 : index
    %1 = vector.load %arg2[%c0_1, %c0_2] : memref<32x3xf32, #tpu.memory_space<vmem>>, vector<32x3xf32>
    %cst = arith.constant dense<0.000000e+00> : vector<32x128xf32>
    %2 = tpu.matmul %1, %0, %cst {dimension_numbers = #tpu.dot_dimension_numbers<[1], [0], [0], [1], [0, 0, 1, 1], [], []>} : vector<32x3xf32>, vector<3x128xf32>, vector<32x128xf32> -> vector<32x128xf32>
    %c0_3 = arith.constant 0 : index
    %c0_4 = arith.constant 0 : index
    %3 = vector.load %arg3[%c0_3, %c0_4] : memref<32x1xf32, #tpu.memory_space<vmem>>, vector<32x1xf32>
    %4 = vector.broadcast %3 : vector<32x1xf32> to vector<32x128xf32>
    %5 = arith.addf %2, %4 : vector<32x128xf32>
    %6 = math.tanh %5 : vector<32x128xf32>
    %c0_5 = arith.constant 0 : index
    %c0_6 = arith.constant 0 : index
    %7 = vector.load %arg4[%c0_5, %c0_6] : memref<32x32xf32, #tpu.memory_space<vmem>>, vector<32x32xf32>
    %cst_7 = arith.constant dense<0.000000e+00> : vector<32x128xf32>
    %8 = tpu.matmul %7, %6, %cst_7 {dimension_numbers = #tpu.dot_dimension_numbers<[1], [0], [0], [1], [0, 0, 1, 1], [], []>} : vector<32x32xf32>, vector<32x128xf32>, vector<32x128xf32> -> vector<32x128xf32>
    %c0_8 = arith.constant 0 : index
    %c0_9 = arith.constant 0 : index
    %9 = vector.load %arg5[%c0_8, %c0_9] : memref<32x1xf32, #tpu.memory_space<vmem>>, vector<32x1xf32>
    %10 = vector.broadcast %9 : vector<32x1xf32> to vector<32x128xf32>
    %11 = arith.addf %8, %10 : vector<32x128xf32>
    %12 = math.tanh %11 : vector<32x128xf32>
    %c0_10 = arith.constant 0 : index
    %c0_11 = arith.constant 0 : index
    %13 = vector.load %arg6[%c0_10, %c0_11] : memref<1x32xf32, #tpu.memory_space<vmem>>, vector<1x32xf32>
    %cst_12 = arith.constant dense<0.000000e+00> : vector<1x128xf32>
    %14 = tpu.matmul %13, %12, %cst_12 {dimension_numbers = #tpu.dot_dimension_numbers<[1], [0], [0], [1], [0, 0, 1, 1], [], []>} : vector<1x32xf32>, vector<32x128xf32>, vector<1x128xf32> -> vector<1x128xf32>
    %c0_13 = arith.constant 0 : index
    %15 = memref.load %arg7[%c0_13] : memref<1xf32, #tpu.memory_space<smem>>
    %16 = vector.broadcast %15 : f32 to vector<1x128xf32>
    %17 = arith.addf %14, %16 : vector<1x128xf32>
    %c0_14 = arith.constant 0 : index
    %c0_15 = arith.constant 0 : index
    %18 = vector.load %arg8[%c0_14, %c0_15] : memref<1x128xf32, #tpu.memory_space<vmem>>, vector<1x128xf32>
    tpu.vector_store %arg8[%c0_14, %c0_15], %17 {strides = array<i32>} : memref<1x128xf32, #tpu.memory_space<vmem>>, vector<1x128xf32>,
    return
  }
  func.func @transform_0(%arg0: i32) -> (i32, i32) {
    %c0_i32 = arith.constant 0 : i32
    %c0_i32_0 = arith.constant 0 : i32
    return %c0_i32, %arg0 : i32, i32
  }
  func.func @transform_1(%arg0: i32) -> (i32, i32) {
    %c0_i32 = arith.constant 0 : i32
    %c0_i32_0 = arith.constant 0 : i32
    %c0_i32_1 = arith.constant 0 : i32
    return %c0_i32, %c0_i32_0 : i32, i32
  }
  func.func @transform_2(%arg0: i32) -> (i32, i32) {
    %c0_i32 = arith.constant 0 : i32
    %c0_i32_0 = arith.constant 0 : i32
    %c0_i32_1 = arith.constant 0 : i32
    return %c0_i32, %c0_i32_0 : i32, i32
  }
  func.func @transform_3(%arg0: i32) -> (i32, i32) {
    %c0_i32 = arith.constant 0 : i32
    %c0_i32_0 = arith.constant 0 : i32
    %c0_i32_1 = arith.constant 0 : i32
    return %c0_i32, %c0_i32_0 : i32, i32
  }
  func.func @transform_4(%arg0: i32) -> (i32, i32) {
    %c0_i32 = arith.constant 0 : i32
    %c0_i32_0 = arith.constant 0 : i32
    %c0_i32_1 = arith.constant 0 : i32
    return %c0_i32, %c0_i32_0 : i32, i32
  }
  func.func @transform_5(%arg0: i32) -> (i32, i32) {
    %c0_i32 = arith.constant 0 : i32
    %c0_i32_0 = arith.constant 0 : i32
    %c0_i32_1 = arith.constant 0 : i32
    return %c0_i32, %c0_i32_0 : i32, i32
  }
  func.func @transform_6(%arg0: i32) -> i32 {
    %c0_i32 = arith.constant 0 : i32
    %c0_i32_0 = arith.constant 0 : i32
    return %c0_i32 : i32
  }
  func.func @transform_7(%arg0: i32) -> (i32, i32) {
    %c0_i32 = arith.constant 0 : i32
    %c0_i32_0 = arith.constant 0 : i32
    return %c0_i32, %arg0 : i32, i32
  }
}

</mosaic_0001>

<llo_original>
// kernel: actor_forward.1
$region0: #{actor_forward.1}
  #allocation0 [shape = 'u32[]', space=smem, size = 0x4, offset = 0x4, fixed_abs, tag = 'smem constant byte address 0x4 - core index']
  #allocation1 [shape = 'u32[144,128]{1,0:T(1,128)}', space=vmem, size = 0x12000, scoped, tag = 'internal scratch']
  #allocation2 [shape = 'f32[1]{0:T(128)S(6)}', space=smem, size = 0x200, scoped, tag = 'scoped memory for actor_forward.1']
  %s0 = inlined_call_operand.vmem [shape: f32[3,128], index: 0, kind: input, shape index: {}]
  %s1 = inlined_call_operand.vmem [shape: f32[32,3], index: 1, kind: input, shape index: {}]
  %s2 = inlined_call_operand.vmem [shape: f32[32,1], index: 2, kind: input, shape index: {}]
  %s3 = inlined_call_operand.vmem [shape: f32[32,32], index: 3, kind: input, shape index: {}]
  %s4 = inlined_call_operand.vmem [shape: f32[32,1], index: 4, kind: input, shape index: {}]
  %s5 = inlined_call_operand.vmem [shape: f32[1,32], index: 5, kind: input, shape index: {}]
  %s6 = inlined_call_operand.<no memory space> [shape: f32[1], index: 6, kind: input, shape index: {}]
  %s7 = inlined_call_operand.vmem [shape: f32[1,128], index: 7, kind: output, shape index: {}]
  %s8 = sld [smem:[#allocation0]]
  $region38: #{actor_forward.1} parent=0
    _
  %s10 = ssub.s32 1, %s8
  %s11 = scalar_select 0, %s10, %s8
  %12 = sst [smem:[#allocation2]] %s6
  // Predicated region
  $region2: #{actor_forward.1} parent=0 // pred_check
    _
  $region3: #{actor_forward.1} parent=0 // pred_check_branch
    %14 = sbr.rel (0) target = $region5
  $region4: #{actor_forward.1} parent=0 // pred_region
    _
  $region5: #{actor_forward.1} parent=0 // pred_fallthru
    _
  // Predicated region
  $region6: #{actor_forward.1} parent=0 // pred_check
    _
  $region7: #{actor_forward.1} parent=0 // pred_check_branch
    %16 = sbr.rel (0) target = $region9
  $region8: #{actor_forward.1} parent=0 // pred_region
    _
  $region9: #{actor_forward.1} parent=0 // pred_fallthru
    _
  // Predicated region
  $region10: #{actor_forward.1} parent=0 // pred_check
    _
  $region11: #{actor_forward.1} parent=0 // pred_check_branch
    %18 = sbr.rel (0) target = $region13
  $region12: #{actor_forward.1} parent=0 // pred_region
    _
  $region13: #{actor_forward.1} parent=0 // pred_fallthru
    _
  // Predicated region
  $region14: #{actor_forward.1} parent=0 // pred_check
    _
  $region15: #{actor_forward.1} parent=0 // pred_check_branch
    %20 = sbr.rel (0) target = $region17
  $region16: #{actor_forward.1} parent=0 // pred_region
    _
  $region17: #{actor_forward.1} parent=0 // pred_fallthru
    _
  // Predicated region
  $region18: #{actor_forward.1} parent=0 // pred_check
    _
  $region19: #{actor_forward.1} parent=0 // pred_check_branch
    %22 = sbr.rel (0) target = $region21
  $region20: #{actor_forward.1} parent=0 // pred_region
    _
  $region21: #{actor_forward.1} parent=0 // pred_fallthru
    _
  // Predicated region
  $region22: #{actor_forward.1} parent=0 // pred_check
    _
  $region23: #{actor_forward.1} parent=0 // pred_check_branch
    %24 = sbr.rel (0) target = $region25
  $region24: #{actor_forward.1} parent=0 // pred_region
    _
  $region25: #{actor_forward.1} parent=0 // pred_fallthru
    _
  // Predicated region
  $region26: #{actor_forward.1} parent=0 // pred_check
    _
  $region27: #{actor_forward.1} parent=0 // pred_check_branch
    %26 = sbr.rel (0) target = $region29
  $region28: #{actor_forward.1} parent=0 // pred_region
    _
  $region29: #{actor_forward.1} parent=0 // pred_fallthru
    _
  %v27 = vld [vmem:[%s0] sm:$0x7]
  %v28 = vld [vmem:[%s1] sm:$0xff]
  %v29 = vld [vmem:[%s1 + $0x8] sm:$0xff]
  %v30 = vld [vmem:[%s1 + $0x10] sm:$0xff]
  %v31 = vld [vmem:[%s1 + $0x18] sm:$0xff]
  %v32 = vld [vmem:[%s2] sm:$0xff]
  %v33 = vld [vmem:[%s2 + $0x8] sm:$0xff]
  %v34 = vld [vmem:[%s2 + $0x10] sm:$0xff]
  %v35 = vld [vmem:[%s2 + $0x18] sm:$0xff]
  %37 = vset.pattern.permute.xlu0 0
  %38 = vperm.xlu0 %37, %v32
  %v39 = vpop.permute.xlu0 %38
  %42 = vset.pattern.permute.xlu0 0
  %43 = vperm.xlu0 %42, %v33
  %v44 = vpop.permute.xlu0 %43
  %47 = vset.pattern.permute.xlu0 0
  %48 = vperm.xlu0 %47, %v34
  %v49 = vpop.permute.xlu0 %48
  %52 = vset.pattern.permute.xlu0 0
  %53 = vperm.xlu0 %52, %v35
  %v54 = vpop.permute.xlu0 %53
  %vm56 = vcmask 23552
  %v58 = vsel %vm56, %v28, 0
  %v61 = vsel %vm56, %v29, 0
  %v64 = vsel %vm56, %v30, 0
  %v67 = vsel %vm56, %v31, 0
  %vm69 = vcmask 1042432
  %v71 = vsel %vm69, %v27, 0
  %73 = vmatprep.subr.mxu0 0.0
  %74 = vmatpush1.msra.mxu0 %v71
  %75 = vmatprep.subr.mxu0 0.0
  %76 = vmatpush1.msra.mxu0 0.0
  %77 = vmatprep.subr.mxu0 0.0
  %78 = vmatpush1.msra.mxu0 0.0
  %79 = vmatprep.subr.mxu0 0.0
  %80 = vmatpush1.msra.mxu0 0.0
  %81 = vmatprep.subr.mxu0 0.0
  %82 = vmatpush1.msra.mxu0 0.0
  %83 = vmatprep.subr.mxu0 0.0
  %84 = vmatpush1.msra.mxu0 0.0
  %85 = vmatprep.subr.mxu0 0.0
  %86 = vmatpush1.msra.mxu0 0.0
  %87 = vmatprep.subr.mxu0 0.0
  %88 = vmatpush1.msra.mxu0 0.0
  %89 = vmatprep.subr.mxu0 0.0
  %90 = vmatpush1.msra.mxu0 0.0
  %91 = vmatprep.subr.mxu0 0.0
  %92 = vmatpush1.msra.mxu0 0.0
  %93 = vmatprep.subr.mxu0 0.0
  %94 = vmatpush1.msra.mxu0 0.0
  %95 = vmatprep.subr.mxu0 0.0
  %96 = vmatpush1.msra.mxu0 0.0
  %97 = vmatprep.subr.mxu0 0.0
  %98 = vmatpush1.msra.mxu0 0.0
  %99 = vmatprep.subr.mxu0 0.0
  %100 = vmatpush1.msra.mxu0 0.0
  %101 = vmatprep.subr.mxu0 0.0
  %102 = vmatpush1.msra.mxu0 0.0
  %103 = vmatprep.subr.mxu0 0.0
  %104 = vmatpush1.msra.mxu0 0.0
  %105 = vmatprep.subr.mxu0 0.0
  %106 = vmatpush1.msra.mxu0 0.0
  %107 = vmatprep.subr.mxu0 0.0
  %108 = vmatpush1.msra.mxu0 0.0
  %109 = vmatprep.subr.mxu0 0.0
  %110 = vmatpush1.msra.mxu0 0.0
  %111 = vmatprep.subr.mxu0 0.0
  %112 = vmatpush1.msra.mxu0 0.0
  %113 = vmatprep.subr.mxu0 0.0
  %114 = vmatpush1.msra.mxu0 0.0
  %115 = vmatprep.subr.mxu0 0.0
  %116 = vmatpush1.msra.mxu0 0.0
  %117 = vmatprep.subr.mxu0 0.0
  %118 = vmatpush1.msra.mxu0 0.0
  %119 = vmatprep.subr.mxu0 0.0
  %120 = vmatpush1.msra.mxu0 0.0
  %121 = vmatprep.subr.mxu0 0.0
  %122 = vmatpush1.msra.mxu0 0.0
  %123 = vmatprep.subr.mxu0 0.0
  %124 = vmatpush1.msra.mxu0 0.0
  %125 = vmatprep.subr.mxu0 0.0
  %126 = vmatpush1.msra.mxu0 0.0
  %127 = vmatprep.subr.mxu0 0.0
  %128 = vmatpush1.msra.mxu0 0.0
  %129 = vmatprep.subr.mxu0 0.0
  %130 = vmatpush1.msra.mxu0 0.0
  %131 = vmatprep.subr.mxu0 0.0
  %132 = vmatpush1.msra.mxu0 0.0
  %133 = vmatprep.subr.mxu0 0.0
  %134 = vmatpush1.msra.mxu0 0.0
  %135 = vmatprep.subr.mxu0 0.0
  %136 = vmatpush1.msra.mxu0 0.0
  %137 = vmatprep.mubr.f32.mxu0 0.0
  %138 = vmatmul.mubr.f32.gmra.mrb[0].mxu0 %v58
  %v139 = vpop.f32.mrb[0].mxu0
  %v140 = vadd.f32 %v39, %v139
  %v141 = vpop.f32.mrb[0].mxu0
  %142 = vmatprep.mubr.f32.mxu0 0.0
  %143 = vmatmul.mubr.f32.gmra.mrb[0].mxu0 %v61
  %v144 = vpop.f32.mrb[0].mxu0
  %v145 = vadd.f32 %v44, %v144
  %v146 = vpop.f32.mrb[0].mxu0
  %147 = vmatprep.mubr.f32.mxu0 0.0
  %148 = vmatmul.mubr.f32.gmra.mrb[0].mxu0 %v64
  %v149 = vpop.f32.mrb[0].mxu0
  %v150 = vadd.f32 %v49, %v149
  %v151 = vpop.f32.mrb[0].mxu0
  %152 = vmatprep.mubr.f32.mxu0 0.0
  %153 = vmatmul.mubr.f32.gmra.mrb[0].mxu0 %v67
  %v154 = vpop.f32.mrb[0].mxu0
  %v155 = vadd.f32 %v54, %v154
  %v156 = vpop.f32.mrb[0].mxu0
  %157 = vdwg.mxu0
  %v158 = vtanh.pop %v140
  %v159 = vtanh.pop %v145
  %v160 = vtanh.pop %v150
  %v161 = vtanh.pop %v155
  %v162 = vld [vmem:[%s3] sm:$0xff]
  %v163 = vld [vmem:[%s3 + $0x8] sm:$0xff]
  %v164 = vld [vmem:[%s3 + $0x10] sm:$0xff]
  %v165 = vld [vmem:[%s3 + $0x18] sm:$0xff]
  %v166 = vld [vmem:[%s4] sm:$0xff]
  %v167 = vld [vmem:[%s4 + $0x8] sm:$0xff]
  %v168 = vld [vmem:[%s4 + $0x10] sm:$0xff]
  %v169 = vld [vmem:[%s4 + $0x18] sm:$0xff]
  %171 = vset.pattern.permute.xlu0 0
  %172 = vperm.xlu0 %171, %v166
  %v173 = vpop.permute.xlu0 %172
  %176 = vset.pattern.permute.xlu0 0
  %177 = vperm.xlu0 %176, %v167
  %v178 = vpop.permute.xlu0 %177
  %181 = vset.pattern.permute.xlu0 0
  %182 = vperm.xlu0 %181, %v168
  %v183 = vpop.permute.xlu0 %182
  %186 = vset.pattern.permute.xlu0 0
  %187 = vperm.xlu0 %186, %v169
  %v188 = vpop.permute.xlu0 %187
  %vm190 = vcmask 261120
  %v192 = vsel %vm190, %v162, 0
  %v195 = vsel %vm190, %v163, 0
  %v198 = vsel %vm190, %v164, 0
  %v201 = vsel %vm190, %v165, 0
  %203 = vmatprep.subr.mxu0 0.0
  %204 = vmatpush1.msra.mxu0 %v158
  %205 = vmatprep.subr.mxu0 0.0
  %206 = vmatpush1.msra.mxu0 %v159
  %207 = vmatprep.subr.mxu0 0.0
  %208 = vmatpush1.msra.mxu0 %v160
  %209 = vmatprep.subr.mxu0 0.0
  %210 = vmatpush1.msra.mxu0 %v161
  %211 = vmatprep.subr.mxu0 0.0
  %212 = vmatpush1.msra.mxu0 0.0
  %213 = vmatprep.subr.mxu0 0.0
  %214 = vmatpush1.msra.mxu0 0.0
  %215 = vmatprep.subr.mxu0 0.0
  %216 = vmatpush1.msra.mxu0 0.0
  %217 = vmatprep.subr.mxu0 0.0
  %218 = vmatpush1.msra.mxu0 0.0
  %219 = vmatprep.subr.mxu0 0.0
  %220 = vmatpush1.msra.mxu0 0.0
  %221 = vmatprep.subr.mxu0 0.0
  %222 = vmatpush1.msra.mxu0 0.0
  %223 = vmatprep.subr.mxu0 0.0
  %224 = vmatpush1.msra.mxu0 0.0
  %225 = vmatprep.subr.mxu0 0.0
  %226 = vmatpush1.msra.mxu0 0.0
  %227 = vmatprep.subr.mxu0 0.0
  %228 = vmatpush1.msra.mxu0 0.0
  %229 = vmatprep.subr.mxu0 0.0
  %230 = vmatpush1.msra.mxu0 0.0
  %231 = vmatprep.subr.mxu0 0.0
  %232 = vmatpush1.msra.mxu0 0.0
  %233 = vmatprep.subr.mxu0 0.0
  %234 = vmatpush1.msra.mxu0 0.0
  %235 = vmatprep.subr.mxu0 0.0
  %236 = vmatpush1.msra.mxu0 0.0
  %237 = vmatprep.subr.mxu0 0.0
  %238 = vmatpush1.msra.mxu0 0.0
  %239 = vmatprep.subr.mxu0 0.0
  %240 = vmatpush1.msra.mxu0 0.0
  %241 = vmatprep.subr.mxu0 0.0
  %242 = vmatpush1.msra.mxu0 0.0
  %243 = vmatprep.subr.mxu0 0.0
  %244 = vmatpush1.msra.mxu0 0.0
  %245 = vmatprep.subr.mxu0 0.0
  %246 = vmatpush1.msra.mxu0 0.0
  %247 = vmatprep.subr.mxu0 0.0
  %248 = vmatpush1.msra.mxu0 0.0
  %249 = vmatprep.subr.mxu0 0.0
  %250 = vmatpush1.msra.mxu0 0.0
  %251 = vmatprep.subr.mxu0 0.0
  %252 = vmatpush1.msra.mxu0 0.0
  %253 = vmatprep.subr.mxu0 0.0
  %254 = vmatpush1.msra.mxu0 0.0
  %255 = vmatprep.subr.mxu0 0.0
  %256 = vmatpush1.msra.mxu0 0.0
  %257 = vmatprep.subr.mxu0 0.0
  %258 = vmatpush1.msra.mxu0 0.0
  %259 = vmatprep.subr.mxu0 0.0
  %260 = vmatpush1.msra.mxu0 0.0
  %261 = vmatprep.subr.mxu0 0.0
  %262 = vmatpush1.msra.mxu0 0.0
  %263 = vmatprep.subr.mxu0 0.0
  %264 = vmatpush1.msra.mxu0 0.0
  %265 = vmatprep.subr.mxu0 0.0
  %266 = vmatpush1.msra.mxu0 0.0
  %267 = vmatprep.mubr.f32.mxu0 0.0
  %268 = vmatmul.mubr.f32.gmra.mrb[0].mxu0 %v192
  %v269 = vpop.f32.mrb[0].mxu0
  %v270 = vadd.f32 %v173, %v269
  %v271 = vpop.f32.mrb[0].mxu0
  %272 = vmatprep.mubr.f32.mxu0 0.0
  %273 = vmatmul.mubr.f32.gmra.mrb[0].mxu0 %v195
  %v274 = vpop.f32.mrb[0].mxu0
  %v275 = vadd.f32 %v178, %v274
  %v276 = vpop.f32.mrb[0].mxu0
  %277 = vmatprep.mubr.f32.mxu0 0.0
  %278 = vmatmul.mubr.f32.gmra.mrb[0].mxu0 %v198
  %v279 = vpop.f32.mrb[0].mxu0
  %v280 = vadd.f32 %v183, %v279
  %v281 = vpop.f32.mrb[0].mxu0
  %282 = vmatprep.mubr.f32.mxu0 0.0
  %283 = vmatmul.mubr.f32.gmra.mrb[0].mxu0 %v201
  %v284 = vpop.f32.mrb[0].mxu0
  %v285 = vadd.f32 %v188, %v284
  %v286 = vpop.f32.mrb[0].mxu0
  %287 = vdwg.mxu0
  %v288 = vtanh.pop %v270
  %v289 = vtanh.pop %v275
  %v290 = vtanh.pop %v280
  %v291 = vtanh.pop %v285
  %v292 = vld [vmem:[%s5] sm:$0x1]
  %s293 = sld [smem:[#allocation2]]
  %v294 = vstv %s293
  %v296 = vsel %vm190, %v292, 0
  %298 = vmatprep.subr.mxu0 0.0
  %299 = vmatpush1.msra.mxu0 %v288
  %300 = vmatprep.subr.mxu0 0.0
  %301 = vmatpush1.msra.mxu0 %v289
  %302 = vmatprep.subr.mxu0 0.0
  %303 = vmatpush1.msra.mxu0 %v290
  %304 = vmatprep.subr.mxu0 0.0
  %305 = vmatpush1.msra.mxu0 %v291
  %306 = vmatprep.subr.mxu0 0.0
  %307 = vmatpush1.msra.mxu0 0.0
  %308 = vmatprep.subr.mxu0 0.0
  %309 = vmatpush1.msra.mxu0 0.0
  %310 = vmatprep.subr.mxu0 0.0
  %311 = vmatpush1.msra.mxu0 0.0
  %312 = vmatprep.subr.mxu0 0.0
  %313 = vmatpush1.msra.mxu0 0.0
  %314 = vmatprep.subr.mxu0 0.0
  %315 = vmatpush1.msra.mxu0 0.0
  %316 = vmatprep.subr.mxu0 0.0
  %317 = vmatpush1.msra.mxu0 0.0
  %318 = vmatprep.subr.mxu0 0.0
  %319 = vmatpush1.msra.mxu0 0.0
  %320 = vmatprep.subr.mxu0 0.0
  %321 = vmatpush1.msra.mxu0 0.0
  %322 = vmatprep.subr.mxu0 0.0
  %323 = vmatpush1.msra.mxu0 0.0
  %324 = vmatprep.subr.mxu0 0.0
  %325 = vmatpush1.msra.mxu0 0.0
  %326 = vmatprep.subr.mxu0 0.0
  %327 = vmatpush1.msra.mxu0 0.0
  %328 = vmatprep.subr.mxu0 0.0
  %329 = vmatpush1.msra.mxu0 0.0
  %330 = vmatprep.subr.mxu0 0.0
  %331 = vmatpush1.msra.mxu0 0.0
  %332 = vmatprep.subr.mxu0 0.0
  %333 = vmatpush1.msra.mxu0 0.0
  %334 = vmatprep.subr.mxu0 0.0
  %335 = vmatpush1.msra.mxu0 0.0
  %336 = vmatprep.subr.mxu0 0.0
  %337 = vmatpush1.msra.mxu0 0.0
  %338 = vmatprep.subr.mxu0 0.0
  %339 = vmatpush1.msra.mxu0 0.0
  %340 = vmatprep.subr.mxu0 0.0
  %341 = vmatpush1.msra.mxu0 0.0
  %342 = vmatprep.subr.mxu0 0.0
  %343 = vmatpush1.msra.mxu0 0.0
  %344 = vmatprep.subr.mxu0 0.0
  %345 = vmatpush1.msra.mxu0 0.0
  %346 = vmatprep.subr.mxu0 0.0
  %347 = vmatpush1.msra.mxu0 0.0
  %348 = vmatprep.subr.mxu0 0.0
  %349 = vmatpush1.msra.mxu0 0.0
  %350 = vmatprep.subr.mxu0 0.0
  %351 = vmatpush1.msra.mxu0 0.0
  %352 = vmatprep.subr.mxu0 0.0
  %353 = vmatpush1.msra.mxu0 0.0
  %354 = vmatprep.subr.mxu0 0.0
  %355 = vmatpush1.msra.mxu0 0.0
  %356 = vmatprep.subr.mxu0 0.0
  %357 = vmatpush1.msra.mxu0 0.0
  %358 = vmatprep.subr.mxu0 0.0
  %359 = vmatpush1.msra.mxu0 0.0
  %360 = vmatprep.subr.mxu0 0.0
  %361 = vmatpush1.msra.mxu0 0.0
  %362 = vmatprep.mubr.f32.mxu0 0.0
  %363 = vmatmul.mubr.f32.gmra.mrb[0].mxu0 %v296
  %v364 = vpop.f32.mrb[0].mxu0
  %v365 = vadd.f32 %v294, %v364
  %v366 = vpop.f32.mrb[0].mxu0
  %367 = vdwg.mxu0
  %368 = vst [vmem:[%s7] sm:$0x1] %v365
  // Predicated region
  $region30: #{actor_forward.1} parent=0 // pred_check
    _
  $region31: #{actor_forward.1} parent=0 // pred_check_branch
    %370 = sbr.rel (0) target = $region33
  $region32: #{actor_forward.1} parent=0 // pred_region
    _
  $region33: #{actor_forward.1} parent=0 // pred_fallthru
    _
  // Predicated region
  $region34: #{actor_forward.1} parent=0 // pred_check
    _
  $region35: #{actor_forward.1} parent=0 // pred_check_branch
    %372 = sbr.rel (0) target = $region37
  $region36: #{actor_forward.1} parent=0 // pred_region
    _
  $region37: #{actor_forward.1} parent=0 // pred_fallthru
    _

</llo_original>
